<compile_context>
chip_gen: v5e
topology: v5e:2x2
jax: 0.10.0
libtpu: 0.0.40
codegen_flags: <defaults>
</compile_context>

<pallas_src>
import functools

import jax
import jax.numpy as jnp
import numpy as np
from jax.experimental import pallas as pl
from jax.experimental.pallas import tpu as pltpu


def _round_up(n, m):
    return (n + m - 1) // m * m


def _vmem_limit_bytes():
    """Per-generation scoped-VMEM budget (v7x: 64 MiB physical, v5e/v6e: 128 MiB)."""
    try:
        cap = int(pltpu.get_tpu_info().vmem_capacity_bytes)
    except Exception:
        cap = 64 << 20                       # conservative (v7x) fallback
    return int(min(cap * 3 // 4, 100 << 20))


def _pick_batch_tile(B, S, H, vmem_limit, batch_tile=None):
    """Static batch-tile choice: biggest tile that fits VMEM, but >= ~4 grid steps."""
    B8 = _round_up(max(B, 1), 8)
    if batch_tile is not None:
        return max(8, min(_round_up(batch_tile, 8), B8))
    # The x block dominates VMEM: double-buffered + ~2 block-sized elementwise temps.
    row_bytes = S * H * 4
    tb_vmem = max(8, (vmem_limit // (4 * row_bytes)) // 8 * 8)
    # TODO(synk): for very long S (where even tb=8 does not fit), add an S grid axis
    # ("arbitrary") with flash-style online softmax instead of shrinking tb further.
    # Aim for >= 4 grid steps so v7x's two TensorCores both get work and the DMA
    # pipeline has something to overlap with.
    tb_steps = _round_up(max(1, (B8 + 3) // 4), 8)
    return max(8, min(tb_vmem, tb_steps, B8))


def _attention_kernel(x_ref, u_ref, m_ref, scores_ref, ctx_ref):
    # x_ref:      (S, tb, H) f32   native layout, only batch padded
    # u_ref:      (1, H)     f32   fused projection vector v @ W
    # m_ref:      (tb, S)    f32   additive mask: 0 where valid, huge-negative else
    # scores_ref: (tb, S)    f32   normalized attention weights
    # ctx_ref:    (tb, H)    f32   attended context
    x = x_ref[...]
    u = u_ref[...]

    # Fused proj_v(proj_w(x)): VPU multiply + lane reduce; no MXU, no attention dim.
    raw = jnp.sum(x * u, axis=-1)                  # (S, tb)
    scores = raw.T + m_ref[...]                    # (tb, S); small XLU transpose

    # Length-masked softmax over the sequence (lane) axis.  Masked entries are a huge
    # finite negative -> exp underflows to exactly 0; the row max always contributes
    # exp(0) = 1, so denom >= 1 and the divide is safe.  (Zero-length rows therefore
    # yield finite weights instead of the PyTorch reference's NaN -- documented.)
    mx = jnp.max(scores, axis=-1, keepdims=True)   # (tb, 1)
    e = jnp.exp(scores - mx)                       # (tb, S)
    denom = jnp.sum(e, axis=-1, keepdims=True)     # (tb, 1), >= 1
    probs = e * (1.0 / denom)                      # exact reciprocal on (tb, 1)
    scores_ref[...] = probs

    # Attention-weighted sum over S on the VPU (batched M=1 mat-vec: not MXU work).
    ctx_ref[...] = jnp.sum(x * probs.T[:, :, None], axis=0)   # (tb, H)


@functools.partial(jax.jit, static_argnames=("batch_tile",))
def dl_attention_forward(x, x_lengths, w, b, v, *, batch_tile=None):
    """x: (S, B, H) f32, x_lengths: (B,) int, w: (A, H), b: (A,), v: (1, A).
    Returns ((B, S) normalized attention scores, (B, H) attended context).

    Note: the proj_w bias only shifts every score by the same constant v @ b and
    softmax is shift-invariant, so `b` cannot affect either output (kept for parity).
    """
    S, B, H = x.shape
    f32 = jnp.float32
    del b  # cancels under softmax (shift invariance)

    # Fused projection vector of proj_v(proj_w(.)) (no nonlinearity in between).
    u = (v.astype(f32) @ w.astype(f32)).reshape(1, H)          # (1, H)

    # Per-generation tiling / VMEM budget (all static, trace-time Python).
    vmem_limit = _vmem_limit_bytes()
    tb = _pick_batch_tile(B, S, H, vmem_limit, batch_tile)
    B_pad = _round_up(B, tb)

    # x stays in its native (S, B, H) layout; pad the batch axis only, and only when
    # needed (no S/H padding: full-dim blocks are exempt from the (8,128) rule).
    x_f = x.astype(f32)
    x_p = x_f if B_pad == B else jnp.pad(x_f, ((0, 0), (0, B_pad - B), (0, 0)))

    # Additive length mask, already in the (B, S) orientation of the scores tile:
    # 0 where valid, huge finite negative elsewhere (padded batch rows fully masked).
    neg = float(jnp.finfo(f32).min) / 2
    lens = jnp.zeros((B_pad,), jnp.int32).at[:B].set(jnp.asarray(x_lengths, jnp.int32))
    valid = jnp.arange(S, dtype=jnp.int32)[None, :] < lens[:, None]      # (B_pad, S)
    mask_add = jnp.where(valid, 0.0, neg).astype(f32)

    grid = (B_pad // tb,)
    scores_p, ctx_p = pl.pallas_call(
        _attention_kernel,
        grid=grid,
        in_specs=[
            pl.BlockSpec((S, tb, H), lambda i: (0, i, 0)),   # x: full S/H, tiled batch
            pl.BlockSpec((1, H), lambda i: (0, 0)),          # fused projection vector
            pl.BlockSpec((tb, S), lambda i: (i, 0)),         # additive length mask
        ],
        out_specs=(
            pl.BlockSpec((tb, S), lambda i: (i, 0)),         # normalized scores
            pl.BlockSpec((tb, H), lambda i: (i, 0)),         # attended context
        ),
        out_shape=(
            jax.ShapeDtypeStruct((B_pad, S), f32),
            jax.ShapeDtypeStruct((B_pad, H), f32),
        ),
        compiler_params=pltpu.CompilerParams(
            dimension_semantics=("parallel",),               # megacore / v7x 2-TC shard
            vmem_limit_bytes=vmem_limit,
        ),
    )(x_p, u, mask_add)

    # TODO(synk): optionally stream x as bf16 (halves HBM traffic on this mem-bound
    # kernel) once a looser output tolerance is acceptable.
    return scores_p[:B], ctx_p[:B]


def _reference(x, x_lengths, w, b, v):
    """Pure-JAX reference mirroring the PyTorch forward."""
    S, B, H = x.shape
    flat = x.reshape(-1, H)
    mlp = flat @ w.T + b
    scores = (mlp @ v.T).reshape(S, B).T                     # (B, S)
    idx = jnp.arange(S)[None, :]
    mask = idx < x_lengths[:, None]
    scores = jnp.where(mask, scores, -jnp.inf)
    probs = jax.nn.softmax(scores, axis=-1)                  # (B, S)
    ctx = jnp.sum(x * probs.T[:, :, None], axis=0)           # (B, H)
    return probs, ctx


if __name__ == "__main__":
    SEQ, BATCH, HIDDEN, ATTN = 8, 2, 32, 16

    key = jax.random.PRNGKey(0)
    kx, kw, kb, kv = jax.random.split(key, 4)

    # Deterministic parameter init (uniform like nn.Linear's default range).
    bound_w = 1.0 / np.sqrt(HIDDEN)
    bound_v = 1.0 / np.sqrt(ATTN)
    proj_w_weight = jax.random.uniform(kw, (ATTN, HIDDEN), jnp.float32, -bound_w, bound_w)
    proj_w_bias = jax.random.uniform(kb, (ATTN,), jnp.float32, -bound_w, bound_w)
    proj_v_weight = jax.random.uniform(kv, (1, ATTN), jnp.float32, -bound_v, bound_v)

    x = jax.random.normal(kx, (SEQ, BATCH, HIDDEN), jnp.float32)
    x_lengths = jnp.array([5, 8], dtype=jnp.int32)

    scores, ctx = dl_attention_forward(x, x_lengths, proj_w_weight, proj_w_bias,
                                       proj_v_weight)
    jax.block_until_ready((scores, ctx))

    ref_scores, ref_ctx = _reference(x, x_lengths, proj_w_weight, proj_w_bias,
                                     proj_v_weight)
    assert scores.shape == (BATCH, SEQ) and ctx.shape == (BATCH, HIDDEN)
    np.testing.assert_allclose(np.asarray(scores), np.asarray(ref_scores),
                               rtol=1e-4, atol=1e-5)
    np.testing.assert_allclose(np.asarray(ctx), np.asarray(ref_ctx),
                               rtol=1e-4, atol=1e-5)

    print("KERNEL_OK")
</pallas_src>

<mosaic_0001>
module attributes {stable_mosaic.version = 11 : i64} {
  func.func @_attention_kernel(%arg0: i32, %arg1: memref<8x8x32xf32, #tpu.memory_space<vmem>>, %arg2: memref<1x32xf32, #tpu.memory_space<vmem>>, %arg3: memref<8x8xf32, #tpu.memory_space<vmem>>, %arg4: memref<8x8xf32, #tpu.memory_space<vmem>>, %arg5: memref<8x32xf32, #tpu.memory_space<vmem>>) attributes {dimension_semantics = [#tpu.dimension_semantics<parallel>], iteration_bounds = array<i64: 1>, scalar_prefetch = 0 : i64, scratch_operands = 0 : i64, tpu.core_type = #tpu.core_type<tc>, window_params = [{transform_indices = @transform_0, window_bounds = array<i64: 8, 8, 32>}, {pipeline_mode = #tpu.pipeline_mode<synchronous>, transform_indices = @transform_1, window_bounds = array<i64: 1, 32>}, {transform_indices = @transform_2, window_bounds = array<i64: 8, 8>}, {transform_indices = @transform_3, window_bounds = array<i64: 8, 8>}, {transform_indices = @transform_4, window_bounds = array<i64: 8, 32>}]} {
    %c0 = arith.constant 0 : index
    %c0_0 = arith.constant 0 : index
    %c0_1 = arith.constant 0 : index
    %0 = vector.load %arg1[%c0, %c0_0, %c0_1] : memref<8x8x32xf32, #tpu.memory_space<vmem>>, vector<8x8x32xf32>
    %c0_2 = arith.constant 0 : index
    %c0_3 = arith.constant 0 : index
    %1 = vector.load %arg2[%c0_2, %c0_3] : memref<1x32xf32, #tpu.memory_space<vmem>>, vector<1x32xf32>
    %2 = vector.shape_cast %1 : vector<1x32xf32> to vector<1x1x32xf32>
    %3 = vector.broadcast %2 : vector<1x1x32xf32> to vector<8x8x32xf32>
    %4 = arith.mulf %0, %3 : vector<8x8x32xf32>
    %cst = arith.constant dense<0.000000e+00> : vector<8x8xf32>
    %5 = vector.multi_reduction <add>, %4, %cst [2] : vector<8x8x32xf32> to vector<8x8xf32>
    %6 = tpu.transpose %5, [1, 0] : vector<8x8xf32> -> vector<8x8xf32>
    %c0_4 = arith.constant 0 : index
    %c0_5 = arith.constant 0 : index
    %7 = vector.load %arg3[%c0_4, %c0_5] : memref<8x8xf32, #tpu.memory_space<vmem>>, vector<8x8xf32>
    %8 = arith.addf %6, %7 : vector<8x8xf32>
    %cst_6 = arith.constant dense<0xFF800000> : vector<8xf32>
    %9 = vector.multi_reduction <maximumf>, %8, %cst_6 [1] : vector<8x8xf32> to vector<8xf32>
    %10 = vector.shape_cast %9 : vector<8xf32> to vector<8x1xf32>
    %11 = vector.broadcast %10 : vector<8x1xf32> to vector<8x8xf32>
    %12 = arith.subf %8, %11 : vector<8x8xf32>
    %13 = math.exp %12 : vector<8x8xf32>
    %cst_7 = arith.constant dense<0.000000e+00> : vector<8xf32>
    %14 = vector.multi_reduction <add>, %13, %cst_7 [1] : vector<8x8xf32> to vector<8xf32>
    %15 = vector.shape_cast %14 : vector<8xf32> to vector<8x1xf32>
    %cst_8 = arith.constant 1.000000e+00 : f32
    %16 = vector.broadcast %cst_8 : f32 to vector<8x1xf32>
    %17 = arith.divf %16, %15 : vector<8x1xf32>
    %18 = vector.broadcast %17 : vector<8x1xf32> to vector<8x8xf32>
    %19 = arith.mulf %13, %18 : vector<8x8xf32>
    %c0_9 = arith.constant 0 : index
    %c0_10 = arith.constant 0 : index
    %20 = vector.load %arg4[%c0_9, %c0_10] : memref<8x8xf32, #tpu.memory_space<vmem>>, vector<8x8xf32>
    tpu.vector_store %arg4[%c0_9, %c0_10], %19 {strides = array<i32>} : memref<8x8xf32, #tpu.memory_space<vmem>>, vector<8x8xf32>,
    %21 = tpu.transpose %19, [1, 0] : vector<8x8xf32> -> vector<8x8xf32>
    %22 = vector.shape_cast %21 : vector<8x8xf32> to vector<8x8x1xf32>
    %23 = vector.broadcast %22 : vector<8x8x1xf32> to vector<8x8x32xf32>
    %24 = arith.mulf %0, %23 : vector<8x8x32xf32>
    %cst_11 = arith.constant dense<0.000000e+00> : vector<8x32xf32>
    %25 = vector.multi_reduction <add>, %24, %cst_11 [0] : vector<8x8x32xf32> to vector<8x32xf32>
    %c0_12 = arith.constant 0 : index
    %c0_13 = arith.constant 0 : index
    %26 = vector.load %arg5[%c0_12, %c0_13] : memref<8x32xf32, #tpu.memory_space<vmem>>, vector<8x32xf32>
    tpu.vector_store %arg5[%c0_12, %c0_13], %25 {strides = array<i32>} : memref<8x32xf32, #tpu.memory_space<vmem>>, vector<8x32xf32>,
    return
  }
  func.func @transform_0(%arg0: i32) -> (i32, i32, i32) {
    %c0_i32 = arith.constant 0 : i32
    %c0_i32_0 = arith.constant 0 : i32
    %c0_i32_1 = arith.constant 0 : i32
    return %c0_i32, %arg0, %c0_i32_0 : i32, i32, i32
  }
  func.func @transform_1(%arg0: i32) -> (i32, i32) {
    %c0_i32 = arith.constant 0 : i32
    %c0_i32_0 = arith.constant 0 : i32
    %c0_i32_1 = arith.constant 0 : i32
    return %c0_i32, %c0_i32_0 : i32, i32
  }
  func.func @transform_2(%arg0: i32) -> (i32, i32) {
    %c0_i32 = arith.constant 0 : i32
    %c0_i32_0 = arith.constant 0 : i32
    return %arg0, %c0_i32 : i32, i32
  }
  func.func @transform_3(%arg0: i32) -> (i32, i32) {
    %c0_i32 = arith.constant 0 : i32
    %c0_i32_0 = arith.constant 0 : i32
    return %arg0, %c0_i32 : i32, i32
  }
  func.func @transform_4(%arg0: i32) -> (i32, i32) {
    %c0_i32 = arith.constant 0 : i32
    %c0_i32_0 = arith.constant 0 : i32
    return %arg0, %c0_i32 : i32, i32
  }
}

</mosaic_0001>

<llo_original>
// kernel: dl_attention_forward.1
$region0: #{dl_attention_forward.1}
  #allocation0 [shape = 'u32[]', space=smem, size = 0x4, offset = 0x4, fixed_abs, tag = 'smem constant byte address 0x4 - core index']
  #allocation1 [shape = 'u32[72,128]{1,0:T(1,128)}', space=vmem, size = 0x9000, scoped, tag = 'internal scratch']
  %s0 = inlined_call_operand.vmem [shape: f32[8,8,32], index: 0, kind: input, shape index: {}]
  %s1 = inlined_call_operand.vmem [shape: f32[1,32], index: 1, kind: input, shape index: {}]
  %s2 = inlined_call_operand.vmem [shape: f32[8,8], index: 2, kind: input, shape index: {}]
  %s3 = inlined_call_operand.vmem [shape: f32[8,8], index: 3, kind: output, shape index: {0}]
  %s4 = inlined_call_operand.vmem [shape: f32[8,32], index: 4, kind: output, shape index: {1}]
  %5 = xla_tuple %s3, %s4
  %s6 = sld [smem:[#allocation0]]
  $region30: #{dl_attention_forward.1} parent=0
    _
  %s8 = ssub.s32 1, %s6
  %s9 = scalar_select 0, %s8, %s6
  // Predicated region
  $region2: #{dl_attention_forward.1} parent=0 // pred_check
    _
  $region3: #{dl_attention_forward.1} parent=0 // pred_check_branch
    %11 = sbr.rel (0) target = $region5
  $region4: #{dl_attention_forward.1} parent=0 // pred_region
    _
  $region5: #{dl_attention_forward.1} parent=0 // pred_fallthru
    _
  // Predicated region
  $region6: #{dl_attention_forward.1} parent=0 // pred_check
    _
  $region7: #{dl_attention_forward.1} parent=0 // pred_check_branch
    %13 = sbr.rel (0) target = $region9
  $region8: #{dl_attention_forward.1} parent=0 // pred_region
    _
  $region9: #{dl_attention_forward.1} parent=0 // pred_fallthru
    _
  // Predicated region
  $region10: #{dl_attention_forward.1} parent=0 // pred_check
    _
  $region11: #{dl_attention_forward.1} parent=0 // pred_check_branch
    %15 = sbr.rel (0) target = $region13
  $region12: #{dl_attention_forward.1} parent=0 // pred_region
    _
  $region13: #{dl_attention_forward.1} parent=0 // pred_fallthru
    _
  %v16 = vld [vmem:[%s0] sm:$0xff]
  %v17 = vld [vmem:[%s0 + $0x8] sm:$0xff]
  %v18 = vld [vmem:[%s0 + $0x10] sm:$0xff]
  %v19 = vld [vmem:[%s0 + $0x18] sm:$0xff]
  %v20 = vld [vmem:[%s0 + $0x20] sm:$0xff]
  %v21 = vld [vmem:[%s0 + $0x28] sm:$0xff]
  %v22 = vld [vmem:[%s0 + $0x30] sm:$0xff]
  %v23 = vld [vmem:[%s0 + $0x38] sm:$0xff]
  %v24 = vld [vmem:[%s1] sm:$0x1]
  %v26 = vperm.slane %v24, 0
  %v28 = vmul.f32 %v16, %v26
  %v29 = vmul.f32 %v17, %v26
  %v30 = vmul.f32 %v18, %v26
  %v31 = vmul.f32 %v19, %v26
  %v32 = vmul.f32 %v20, %v26
  %v33 = vmul.f32 %v21, %v26
  %v34 = vmul.f32 %v22, %v26
  %v35 = vmul.f32 %v23, %v26
  %vm36 = vcmask 261120
  %v37 = vsel %vm36, %v28, 0.0
  %38 = vadd.xlane.f32.xlu0 %v37
  %v39 = vpop.xlane.xlu0 %38
  %v40 = vsel %vm36, %v29, 0.0
  %41 = vadd.xlane.f32.xlu0 %v40
  %v42 = vpop.xlane.xlu0 %41
  %v43 = vsel %vm36, %v30, 0.0
  %44 = vadd.xlane.f32.xlu0 %v43
  %v45 = vpop.xlane.xlu0 %44
  %v46 = vsel %vm36, %v31, 0.0
  %47 = vadd.xlane.f32.xlu0 %v46
  %v48 = vpop.xlane.xlu0 %47
  %v49 = vsel %vm36, %v32, 0.0
  %50 = vadd.xlane.f32.xlu0 %v49
  %v51 = vpop.xlane.xlu0 %50
  %v52 = vsel %vm36, %v33, 0.0
  %53 = vadd.xlane.f32.xlu0 %v52
  %v54 = vpop.xlane.xlu0 %53
  %v55 = vsel %vm36, %v34, 0.0
  %56 = vadd.xlane.f32.xlu0 %v55
  %v57 = vpop.xlane.xlu0 %56
  %v58 = vsel %vm36, %v35, 0.0
  %59 = vadd.xlane.f32.xlu0 %v58
  %v60 = vpop.xlane.xlu0 %59
  %v69 = vlaneseq
  %v70 = vand.u32 %v69, 127
  %v71 = vperm.slane %v39, %v70
  %v72 = vperm.slane %v42, %v70
  %v73 = vperm.slane %v45, %v70
  %v74 = vperm.slane %v48, %v70
  %v75 = vperm.slane %v51, %v70
  %v76 = vperm.slane %v54, %v70
  %v77 = vperm.slane %v57, %v70
  %v78 = vperm.slane %v60, %v70
  %vm79 = vcmask 1041409
  %v80 = vsel %vm79, %v72, %v71
  %vm81 = vcmask 1042434
  %v82 = vsel %vm81, %v73, %v80
  %vm83 = vcmask 1043459
  %v84 = vsel %vm83, %v74, %v82
  %vm85 = vcmask 1044484
  %v86 = vsel %vm85, %v75, %v84
  %vm87 = vcmask 1045509
  %v88 = vsel %vm87, %v76, %v86
  %vm89 = vcmask 1046534
  %v90 = vsel %vm89, %v77, %v88
  %vm91 = vcmask 1047559
  %v92 = vsel %vm91, %v78, %v90
  %94 = vxpose.xlu0.b32.start [1/16] %v92, 128
  %95 = vxpose.xlu0.b32.cont [2/16] 0.0, 128
  %96 = vxpose.xlu0.b32.cont [3/16] 0.0, 128
  %97 = vxpose.xlu0.b32.cont [4/16] 0.0, 128
  %98 = vxpose.xlu0.b32.cont [5/16] 0.0, 128
  %99 = vxpose.xlu0.b32.cont [6/16] 0.0, 128
  %100 = vxpose.xlu0.b32.cont [7/16] 0.0, 128
  %101 = vxpose.xlu0.b32.cont [8/16] 0.0, 128
  %102 = vxpose.xlu0.b32.cont [9/16] 0.0, 128
  %103 = vxpose.xlu0.b32.cont [10/16] 0.0, 128
  %104 = vxpose.xlu0.b32.cont [11/16] 0.0, 128
  %105 = vxpose.xlu0.b32.cont [12/16] 0.0, 128
  %106 = vxpose.xlu0.b32.cont [13/16] 0.0, 128
  %107 = vxpose.xlu0.b32.cont [14/16] 0.0, 128
  %108 = vxpose.xlu0.b32.cont [15/16] 0.0, 128
  %109 = vxpose.xlu0.b32.end [16/16] 0.0, 128
  %v110 = vpop.trf.xlu0
  %v111 = vpop.trf.xlu0
  %v112 = vpop.trf.xlu0
  %v113 = vpop.trf.xlu0
  %v114 = vpop.trf.xlu0
  %v115 = vpop.trf.xlu0
  %v116 = vpop.trf.xlu0
  %v117 = vpop.trf.xlu0
  %v118 = vpop.trf.xlu0
  %v119 = vpop.trf.xlu0
  %v120 = vpop.trf.xlu0
  %v121 = vpop.trf.xlu0
  %v122 = vpop.trf.xlu0
  %v123 = vpop.trf.xlu0
  %v124 = vpop.trf.xlu0
  %v125 = vpop.trf.xlu0
  %v126 = vld [vmem:[%s2] sm:$0xff]
  %v127 = vadd.f32 %v110, %v126
  %vm128 = vcmask 64512
  %v129 = vsel %vm128, %v127, -inf
  %130 = vmax.xlane.f32.xlu0 %v129
  %v131 = vpop.xlane.xlu0 %130
  %v132 = vsub.f32 %v127, %v131
  %v133 = vmul.f32 %v132, 1.442695
  %v134 = vpow.pop %v133
  %v135 = vsel %vm128, %v134, 0.0
  %136 = vadd.xlane.f32.xlu0 %v135
  %v137 = vpop.xlane.xlu0 %136
  %v138 = vrcp.pop %v137
  %v139 = vmul.f32 %v137, %v138
  %v140 = vsub.f32 1.0, %v139
  %v141 = vmul.f32 %v138, %v140
  %v142 = vadd.f32 %v138, %v141
  %vm143 = vweird.f32 %v137
  %vm144 = vweird.f32 %v138
  %vm145 = vmor %vm143, %vm144
  %v146 = vsel %vm145, %v138, %v142
  %v147 = vand.u32 2147483647, %v137
  %vm148 = vcmp.eq.f32.partialorder %v147, 8.507059e+37
  %v149 = vand.u32 %v137, 2147483648
  %v150 = vor.u32 1.1754944e-38, %v149
  %v151 = vsel %vm148, %v150, %v146
  %v152 = vmul.f32 1.0, %v151
  %v153 = vmul.f32 %v134, %v152
  %154 = vst.msk [vmem:[%s3] sm:$0xff] %vm128, %v153
  %155 = vxpose.xlu0.b32.start [1/16] %v153, 128
  %156 = vxpose.xlu0.b32.cont [2/16] 0.0, 128
  %157 = vxpose.xlu0.b32.cont [3/16] 0.0, 128
  %158 = vxpose.xlu0.b32.cont [4/16] 0.0, 128
  %159 = vxpose.xlu0.b32.cont [5/16] 0.0, 128
  %160 = vxpose.xlu0.b32.cont [6/16] 0.0, 128
  %161 = vxpose.xlu0.b32.cont [7/16] 0.0, 128
  %162 = vxpose.xlu0.b32.cont [8/16] 0.0, 128
  %163 = vxpose.xlu0.b32.cont [9/16] 0.0, 128
  %164 = vxpose.xlu0.b32.cont [10/16] 0.0, 128
  %165 = vxpose.xlu0.b32.cont [11/16] 0.0, 128
  %166 = vxpose.xlu0.b32.cont [12/16] 0.0, 128
  %167 = vxpose.xlu0.b32.cont [13/16] 0.0, 128
  %168 = vxpose.xlu0.b32.cont [14/16] 0.0, 128
  %169 = vxpose.xlu0.b32.cont [15/16] 0.0, 128
  %170 = vxpose.xlu0.b32.end [16/16] 0.0, 128
  %v171 = vpop.trf.xlu0
  %v172 = vpop.trf.xlu0
  %v173 = vpop.trf.xlu0
  %v174 = vpop.trf.xlu0
  %v175 = vpop.trf.xlu0
  %v176 = vpop.trf.xlu0
  %v177 = vpop.trf.xlu0
  %v178 = vpop.trf.xlu0
  %v179 = vpop.trf.xlu0
  %v180 = vpop.trf.xlu0
  %v181 = vpop.trf.xlu0
  %v182 = vpop.trf.xlu0
  %v183 = vpop.trf.xlu0
  %v184 = vpop.trf.xlu0
  %v185 = vpop.trf.xlu0
  %v186 = vpop.trf.xlu0
  %v187 = vperm.slane %v171, 0
  %v188 = vlaneseq
  %v189 = vshrl.u32 %v188, 7
  %191 = vset.pattern.permute.xlu0 %v189
  %192 = vperm.xlu0 %191, %v187
  %v193 = vpop.permute.xlu0 %192
  %v194 = vperm.slane %v171, 1
  %v195 = vlaneseq
  %v196 = vshrl.u32 %v195, 7
  %198 = vset.pattern.permute.xlu0 %v196
  %199 = vperm.xlu0 %198, %v194
  %v200 = vpop.permute.xlu0 %199
  %v201 = vperm.slane %v171, 2
  %v202 = vlaneseq
  %v203 = vshrl.u32 %v202, 7
  %205 = vset.pattern.permute.xlu0 %v203
  %206 = vperm.xlu0 %205, %v201
  %v207 = vpop.permute.xlu0 %206
  %v208 = vperm.slane %v171, 3
  %v209 = vlaneseq
  %v210 = vshrl.u32 %v209, 7
  %212 = vset.pattern.permute.xlu0 %v210
  %213 = vperm.xlu0 %212, %v208
  %v214 = vpop.permute.xlu0 %213
  %v215 = vperm.slane %v171, 4
  %v216 = vlaneseq
  %v217 = vshrl.u32 %v216, 7
  %219 = vset.pattern.permute.xlu0 %v217
  %220 = vperm.xlu0 %219, %v215
  %v221 = vpop.permute.xlu0 %220
  %v222 = vperm.slane %v171, 5
  %v223 = vlaneseq
  %v224 = vshrl.u32 %v223, 7
  %226 = vset.pattern.permute.xlu0 %v224
  %227 = vperm.xlu0 %226, %v222
  %v228 = vpop.permute.xlu0 %227
  %v229 = vperm.slane %v171, 6
  %v230 = vlaneseq
  %v231 = vshrl.u32 %v230, 7
  %233 = vset.pattern.permute.xlu0 %v231
  %234 = vperm.xlu0 %233, %v229
  %v235 = vpop.permute.xlu0 %234
  %v236 = vperm.slane %v171, 7
  %v237 = vlaneseq
  %v238 = vshrl.u32 %v237, 7
  %240 = vset.pattern.permute.xlu0 %v238
  %241 = vperm.xlu0 %240, %v236
  %v242 = vpop.permute.xlu0 %241
  %v243 = vmul.f32 %v16, %v193
  %v244 = vmul.f32 %v17, %v200
  %v245 = vmul.f32 %v18, %v207
  %v246 = vmul.f32 %v19, %v214
  %v247 = vmul.f32 %v20, %v221
  %v248 = vmul.f32 %v21, %v228
  %v249 = vmul.f32 %v22, %v235
  %v250 = vmul.f32 %v23, %v242
  %v251 = vsel %vm36, %v243, 0.0
  %v252 = vsel %vm36, %v244, 0.0
  %v253 = vadd.f32 %v251, %v252
  %v254 = vsel %vm36, %v245, 0.0
  %v255 = vadd.f32 %v253, %v254
  %v256 = vsel %vm36, %v246, 0.0
  %v257 = vadd.f32 %v255, %v256
  %v258 = vsel %vm36, %v247, 0.0
  %v259 = vadd.f32 %v257, %v258
  %v260 = vsel %vm36, %v248, 0.0
  %v261 = vadd.f32 %v259, %v260
  %v262 = vsel %vm36, %v249, 0.0
  %v263 = vadd.f32 %v261, %v262
  %v264 = vsel %vm36, %v250, 0.0
  %v265 = vadd.f32 %v263, %v264
  %266 = vst.msk [vmem:[%s4] sm:$0xff] %vm36, %v265
  // Predicated region
  $region14: #{dl_attention_forward.1} parent=0 // pred_check
    _
  $region15: #{dl_attention_forward.1} parent=0 // pred_check_branch
    %268 = sbr.rel (0) target = $region17
  $region16: #{dl_attention_forward.1} parent=0 // pred_region
    _
  $region17: #{dl_attention_forward.1} parent=0 // pred_fallthru
    _
  // Predicated region
  $region18: #{dl_attention_forward.1} parent=0 // pred_check
    _
  $region19: #{dl_attention_forward.1} parent=0 // pred_check_branch
    %270 = sbr.rel (0) target = $region21
  $region20: #{dl_attention_forward.1} parent=0 // pred_region
    _
  $region21: #{dl_attention_forward.1} parent=0 // pred_fallthru
    _
  // Predicated region
  $region22: #{dl_attention_forward.1} parent=0 // pred_check
    _
  $region23: #{dl_attention_forward.1} parent=0 // pred_check_branch
    %272 = sbr.rel (0) target = $region25
  $region24: #{dl_attention_forward.1} parent=0 // pred_region
    _
  $region25: #{dl_attention_forward.1} parent=0 // pred_fallthru
    _
  // Predicated region
  $region26: #{dl_attention_forward.1} parent=0 // pred_check
    _
  $region27: #{dl_attention_forward.1} parent=0 // pred_check_branch
    %274 = sbr.rel (0) target = $region29
  $region28: #{dl_attention_forward.1} parent=0 // pred_region
    _
  $region29: #{dl_attention_forward.1} parent=0 // pred_fallthru
    _

</llo_original>
